<compile_context>
chip_gen: v5e
topology: v5e:2x2
jax: 0.10.0
libtpu: 0.0.40
codegen_flags: <defaults>
</compile_context>

<pallas_src>
import functools

import jax
import jax.numpy as jnp
from jax.experimental import pallas as pl
from jax.experimental.pallas import tpu as pltpu


# ----------------------------------------------------------------------------
# small helpers
# ----------------------------------------------------------------------------
def _round_up(x, m):
    return ((x + m - 1) // m) * m


def _row_tiles(m, tm):
    """Pick a sublane-aligned row tile and the padded row count (cdiv + pad, no assert)."""
    tm = int(min(tm, _round_up(m, 8)))
    tm = max(8, _round_up(tm, 8))
    mp = _round_up(m, tm)
    return tm, mp


_VMEM_LIMIT_CACHE = None


def _vmem_limit_bytes():
    """Raised scoped-VMEM limit with headroom (100 MiB on 128 MiB chips, ~56 MiB on v7x)."""
    global _VMEM_LIMIT_CACHE
    if _VMEM_LIMIT_CACHE is None:
        try:
            cap = int(pltpu.get_tpu_info().vmem_capacity_bytes)
        except Exception:
            cap = 64 * 1024 * 1024  # conservative fallback
        _VMEM_LIMIT_CACHE = int(min(100 * 1024 * 1024, cap * 7 // 8))
    return _VMEM_LIMIT_CACHE


# ----------------------------------------------------------------------------
# window partition / unpartition and relative-position bias (layout plumbing, plain JAX)
# ----------------------------------------------------------------------------
def window_partition(x, window_size):
    b, h, w, c = x.shape
    pad_h = (-h) % window_size
    pad_w = (-w) % window_size
    if pad_h or pad_w:
        x = jnp.pad(x, ((0, 0), (0, pad_h), (0, pad_w), (0, 0)))
    hp, wp = h + pad_h, w + pad_w
    x = x.reshape(b, hp // window_size, window_size, wp // window_size, window_size, c)
    windows = x.transpose(0, 1, 3, 2, 4, 5).reshape(-1, window_size, window_size, c)
    return windows, (hp, wp)


def window_unpartition(windows, window_size, pad_hw, hw):
    hp, wp = pad_hw
    h, w = hw
    b = windows.shape[0] // (hp * wp // window_size // window_size)
    x = windows.reshape(b, hp // window_size, wp // window_size, window_size, window_size, -1)
    x = x.transpose(0, 1, 3, 2, 4, 5).reshape(b, hp, wp, -1)
    return x[:, :h, :w, :]


def get_rel_pos(q_size, k_size, rel_pos):
    max_rel_dist = int(2 * max(q_size, k_size) - 1)
    # TODO(synk): F.interpolate('linear') resize of the rel-pos table when its length
    # != 2*size-1 is not implemented (never triggered when input_size matches, as in SAM).
    assert rel_pos.shape[0] == max_rel_dist, "rel_pos resize path not implemented"
    q_coords = jnp.arange(q_size)[:, None] * max(k_size / q_size, 1.0)
    k_coords = jnp.arange(k_size)[None, :] * max(q_size / k_size, 1.0)
    rel = (q_coords - k_coords) + (k_size - 1) * max(q_size / k_size, 1.0)
    return rel_pos[rel.astype(jnp.int32)]


def _decomposed_rel_pos_bias(q, rel_pos_h, rel_pos_w, q_size, k_size):
    """Decomposed rel-pos additive bias, shape (B*heads, q_h*q_w, k_h*k_w), f32."""
    q_h, q_w = q_size
    k_h, k_w = k_size
    rh = get_rel_pos(q_h, k_h, rel_pos_h).astype(jnp.float32)
    rw = get_rel_pos(q_w, k_w, rel_pos_w).astype(jnp.float32)
    bn, _, dim = q.shape
    r_q = q.reshape(bn, q_h, q_w, dim).astype(jnp.float32)
    rel_h = jnp.einsum("bhwc,hkc->bhwk", r_q, rh)
    rel_w = jnp.einsum("bhwc,wkc->bhwk", r_q, rw)
    bias = rel_h[:, :, :, :, None] + rel_w[:, :, :, None, :]
    return bias.reshape(bn, q_h * q_w, k_h * k_w)


# ----------------------------------------------------------------------------
# Kernel 1: LayerNorm (norm1)
# ----------------------------------------------------------------------------
def _layernorm_kernel(x_ref, g_ref, b_ref, o_ref, *, eps):
    x = x_ref[...].astype(jnp.float32)
    mu = jnp.mean(x, axis=-1, keepdims=True)
    xc = x - mu
    var = jnp.mean(xc * xc, axis=-1, keepdims=True)
    y = xc * jax.lax.rsqrt(var + eps)
    y = y * g_ref[...].astype(jnp.float32) + b_ref[...].astype(jnp.float32)
    o_ref[...] = y.astype(o_ref.dtype)


def layernorm(x2d, gamma, beta, *, eps=1e-5, out_dtype=None, tm=256):
    m, d = x2d.shape
    out_dtype = x2d.dtype if out_dtype is None else out_dtype
    tm_, mp = _row_tiles(m, tm)
    xp = jnp.pad(x2d, ((0, mp - m), (0, 0)))
    out = pl.pallas_call(
        functools.partial(_layernorm_kernel, eps=eps),
        out_shape=jax.ShapeDtypeStruct((mp, d), out_dtype),
        grid_spec=pltpu.PrefetchScalarGridSpec(
            num_scalar_prefetch=0,
            grid=(mp // tm_,),
            in_specs=[
                pl.BlockSpec((tm_, d), lambda i: (i, 0)),
                pl.BlockSpec((1, d), lambda i: (0, 0)),
                pl.BlockSpec((1, d), lambda i: (0, 0)),
            ],
            out_specs=pl.BlockSpec((tm_, d), lambda i: (i, 0)),
        ),
        compiler_params=pltpu.CompilerParams(
            dimension_semantics=("parallel",),
            vmem_limit_bytes=_vmem_limit_bytes(),
        ),
    )(xp, gamma.reshape(1, d), beta.reshape(1, d))
    return out[:m]


# ----------------------------------------------------------------------------
# Kernel 2: tiled Linear  y = x @ Wt + b   (qkv and proj projections)
# ----------------------------------------------------------------------------
def _linear_kernel(x_ref, wt_ref, b_ref, o_ref):
    acc = jnp.dot(x_ref[...], wt_ref[...], preferred_element_type=jnp.float32)
    o_ref[...] = (acc + b_ref[...].astype(jnp.float32)).astype(o_ref.dtype)


def linear(x2d, wt, b, *, out_dtype, tm=256, mxu_dtype=jnp.bfloat16):
    m, din = x2d.shape
    dout = wt.shape[1]
    tm_, mp = _row_tiles(m, tm)
    xp = jnp.pad(x2d, ((0, mp - m), (0, 0))).astype(mxu_dtype)
    out = pl.pallas_call(
        _linear_kernel,
        out_shape=jax.ShapeDtypeStruct((mp, dout), out_dtype),
        grid_spec=pltpu.PrefetchScalarGridSpec(
            num_scalar_prefetch=0,
            grid=(mp // tm_,),
            in_specs=[
                pl.BlockSpec((tm_, din), lambda i: (i, 0)),
                pl.BlockSpec((din, dout), lambda i: (0, 0)),  # weight VMEM-resident
                pl.BlockSpec((1, dout), lambda i: (0, 0)),
            ],
            out_specs=pl.BlockSpec((tm_, dout), lambda i: (i, 0)),
        ),
        compiler_params=pltpu.CompilerParams(
            dimension_semantics=("parallel",),
            vmem_limit_bytes=_vmem_limit_bytes(),
        ),
    )(xp, wt.astype(mxu_dtype), b.reshape(1, dout))
    return out[:m]


# ----------------------------------------------------------------------------
# Kernel 3: attention core, one (window x head) per grid step
# ----------------------------------------------------------------------------
def _attn_kernel(q_ref, k_ref, v_ref, bias_ref, o_ref, *, scale):
    q = q_ref[0]                 # (N, hd) bf16
    k = k_ref[0]                 # (N, hd) bf16
    v = v_ref[0]                 # (N, hd) bf16
    s = jax.lax.dot_general(q, k, dimension_numbers=(((1,), (1,)), ((), ())),
                            preferred_element_type=jnp.float32)
    s = s * scale + bias_ref[0].astype(jnp.float32)
    s = s - jnp.max(s, axis=-1, keepdims=True)
    p = jnp.exp(s)
    p = p / jnp.sum(p, axis=-1, keepdims=True)
    o = jnp.dot(p.astype(v.dtype), v, preferred_element_type=jnp.float32)
    o_ref[0] = o.astype(o_ref.dtype)


def attn_core(q, k, v, bias, *, scale, out_dtype):
    # TODO(synk): global attention (window_size=0) at full SAM scale (N=4096) needs a
    # flash-style kv-tiled kernel; this whole-window kernel targets windowed blocks (N=ws*ws).
    g, n, hd = q.shape
    return pl.pallas_call(
        functools.partial(_attn_kernel, scale=scale),
        out_shape=jax.ShapeDtypeStruct((g, n, hd), out_dtype),
        grid_spec=pltpu.PrefetchScalarGridSpec(
            num_scalar_prefetch=0,
            grid=(g,),
            in_specs=[
                pl.BlockSpec((1, n, hd), lambda i: (i, 0, 0)),
                pl.BlockSpec((1, n, hd), lambda i: (i, 0, 0)),
                pl.BlockSpec((1, n, hd), lambda i: (i, 0, 0)),
                pl.BlockSpec((1, n, n), lambda i: (i, 0, 0)),
            ],
            out_specs=pl.BlockSpec((1, n, hd), lambda i: (i, 0, 0)),
        ),
        compiler_params=pltpu.CompilerParams(
            dimension_semantics=("parallel",),
            vmem_limit_bytes=_vmem_limit_bytes(),
        ),
    )(q, k, v, bias)


# ----------------------------------------------------------------------------
# Kernel 4: fused  y = shortcut + attn ; out = y + lin2(GELU(lin1(norm2(y))))
#           hidden dim tiled as trailing "arbitrary" grid axis with f32 VMEM accumulator
# ----------------------------------------------------------------------------
def _fused_mlp_kernel(s_ref, a_ref, g2_ref, bt2_ref, w1t_ref, b1_ref, w2t_ref, b2_ref,
                      o_ref, xn_ref, acc_ref, *, eps):
    kh = pl.program_id(1)

    @pl.when(kh == 0)
    def _init():
        y = s_ref[...].astype(jnp.float32) + a_ref[...].astype(jnp.float32)
        mu = jnp.mean(y, axis=-1, keepdims=True)
        yc = y - mu
        var = jnp.mean(yc * yc, axis=-1, keepdims=True)
        yn = yc * jax.lax.rsqrt(var + eps)
        yn = yn * g2_ref[...].astype(jnp.float32) + bt2_ref[...].astype(jnp.float32)
        xn_ref[...] = yn.astype(xn_ref.dtype)           # bf16 MXU operand, computed once per row tile
        acc_ref[...] = jnp.zeros_like(acc_ref)

    # partial hidden tile: h_k = GELU(xn @ W1t[:, k] + b1[k]); acc += h_k @ W2t[k, :]
    h = jnp.dot(xn_ref[...], w1t_ref[...], preferred_element_type=jnp.float32)
    h = h + b1_ref[...].astype(jnp.float32)
    h = jax.nn.gelu(h, approximate=False)               # exact (erf) GELU, like nn.GELU default
    acc_ref[...] += jnp.dot(h.astype(w2t_ref.dtype), w2t_ref[...],
                            preferred_element_type=jnp.float32)

    @pl.when(kh == pl.num_programs(1) - 1)
    def _finalize():
        y = s_ref[...].astype(jnp.float32) + a_ref[...].astype(jnp.float32)
        out = y + acc_ref[...] + b2_ref[...].astype(jnp.float32)   # b2 added exactly once
        o_ref[...] = out.astype(o_ref.dtype)


def fused_ln_mlp_residual(shortcut2d, attn2d, gamma2, beta2, w1t, b1, w2t, b2,
                          *, eps=1e-5, tm=256, th=512, mxu_dtype=jnp.bfloat16):
    m, d = shortcut2d.shape
    hm = w1t.shape[1]
    tm_, mp = _row_tiles(m, tm)

    # hidden-dim tile: multiple of 128 lanes (or the full dim), padded with zeros if needed
    th_ = int(min(th, hm))
    if th_ < hm:
        th_ = max(128, (th_ // 128) * 128)
        hp = _round_up(hm, th_)
    else:
        hp = hm
    if hp != hm:
        w1t = jnp.pad(w1t, ((0, 0), (0, hp - hm)))
        b1 = jnp.pad(b1, ((0, hp - hm),))
        w2t = jnp.pad(w2t, ((0, hp - hm), (0, 0)))

    sp = jnp.pad(shortcut2d, ((0, mp - m), (0, 0)))
    ap = jnp.pad(attn2d, ((0, mp - m), (0, 0)))

    out = pl.pallas_call(
        functools.partial(_fused_mlp_kernel, eps=eps),
        out_shape=jax.ShapeDtypeStruct((mp, d), shortcut2d.dtype),
        grid_spec=pltpu.PrefetchScalarGridSpec(
            num_scalar_prefetch=0,
            grid=(mp // tm_, hp // th_),            # (row tiles, hidden tiles); reduction last
            in_specs=[
                pl.BlockSpec((tm_, d), lambda i, j: (i, 0)),    # shortcut
                pl.BlockSpec((tm_, d), lambda i, j: (i, 0)),    # attention output
                pl.BlockSpec((1, d), lambda i, j: (0, 0)),      # norm2 gamma
                pl.BlockSpec((1, d), lambda i, j: (0, 0)),      # norm2 beta
                pl.BlockSpec((d, th_), lambda i, j: (0, j)),    # W1^T hidden tile
                pl.BlockSpec((1, th_), lambda i, j: (0, j)),    # b1 hidden tile
                pl.BlockSpec((th_, d), lambda i, j: (j, 0)),    # W2^T hidden tile
                pl.BlockSpec((1, d), lambda i, j: (0, 0)),      # b2
            ],
            out_specs=pl.BlockSpec((tm_, d), lambda i, j: (i, 0)),  # resident accumulator target
            scratch_shapes=[
                pltpu.VMEM((tm_, d), mxu_dtype),    # normalized activations (reused across j)
                pltpu.VMEM((tm_, d), jnp.float32),  # f32 accumulator
            ],
        ),
        compiler_params=pltpu.CompilerParams(
            dimension_semantics=("parallel", "arbitrary"),
            vmem_limit_bytes=_vmem_limit_bytes(),
        ),
    )(sp, ap, gamma2.reshape(1, d), beta2.reshape(1, d),
      w1t.astype(mxu_dtype), b1.reshape(1, hp), w2t.astype(mxu_dtype), b2.reshape(1, d))
    return out[:m]


# ----------------------------------------------------------------------------
# Full Block forward
# ----------------------------------------------------------------------------
def sam_block_forward(x, params, *, num_heads, window_size=0, use_rel_pos=False,
                      ln_eps=1e-5, tm=256, th_mlp=512, mxu_dtype=jnp.bfloat16):
    """x: [B, H, W, D]. params holds pre-transposed (in,out) bf16 weights (one-time setup)."""
    b, h, w, d = x.shape
    hd = d // num_heads
    scale = hd ** -0.5

    # norm1 (Pallas)
    xn = layernorm(x.reshape(b * h * w, d), params["norm1_g"], params["norm1_b"],
                   eps=ln_eps, out_dtype=mxu_dtype, tm=tm).reshape(b, h, w, d)

    # window partition (layout plumbing)
    if window_size > 0:
        xw, pad_hw = window_partition(xn, window_size)
        qh = qw = window_size
    else:
        xw, pad_hw = xn, (h, w)
        qh, qw = h, w
    bw = xw.shape[0]
    n = qh * qw

    # qkv projection (Pallas)
    qkv = linear(xw.reshape(bw * n, d), params["qkv_wt"], params["qkv_b"],
                 out_dtype=mxu_dtype, tm=tm, mxu_dtype=mxu_dtype)
    qkv = qkv.reshape(bw, n, 3, num_heads, hd).transpose(2, 0, 3, 1, 4)
    qkv = qkv.reshape(3, bw * num_heads, n, hd)
    q, k, v = qkv[0], qkv[1], qkv[2]

    # decomposed relative-position bias (plain-JAX gather + small einsums)
    if use_rel_pos:
        bias = _decomposed_rel_pos_bias(q, params["rel_pos_h"], params["rel_pos_w"],
                                        (qh, qw), (qh, qw))
    else:
        bias = jnp.zeros((bw * num_heads, n, n), jnp.float32)

    # attention core (Pallas)
    o = attn_core(q, k, v, bias, scale=scale, out_dtype=mxu_dtype)
    o = o.reshape(bw, num_heads, qh, qw, hd).transpose(0, 2, 3, 1, 4).reshape(bw * n, d)

    # output projection (Pallas), back to residual dtype
    xo = linear(o, params["proj_wt"], params["proj_b"], out_dtype=x.dtype,
                tm=tm, mxu_dtype=mxu_dtype).reshape(bw, qh, qw, d)

    if window_size > 0:
        xo = window_unpartition(xo, window_size, pad_hw, (h, w))

    # fused: y = x + attn ; out = y + MLP(norm2(y))   (Pallas, hidden-dim tiled)
    out = fused_ln_mlp_residual(x.reshape(b * h * w, d), xo.reshape(b * h * w, d),
                                params["norm2_g"], params["norm2_b"],
                                params["mlp_w1t"], params["mlp_b1"],
                                params["mlp_w2t"], params["mlp_b2"],
                                eps=ln_eps, tm=tm, th=th_mlp, mxu_dtype=mxu_dtype)
    return out.reshape(b, h, w, d)


# ----------------------------------------------------------------------------
# Plain-JAX reference (PyTorch semantics, same bf16-operand / f32-accumulation policy)
# ----------------------------------------------------------------------------
def _ref_block(x, p, *, num_heads, window_size, use_rel_pos, eps=1e-5, mxu_dtype=jnp.bfloat16):
    b, h, w, d = x.shape
    hd = d // num_heads
    scale = hd ** -0.5

    def ln(v, g, bb):
        v = v.astype(jnp.float32)
        mu = jnp.mean(v, axis=-1, keepdims=True)
        var = jnp.mean((v - mu) ** 2, axis=-1, keepdims=True)
        return (v - mu) * jax.lax.rsqrt(var + eps) * g + bb

    def lin(v, wgt, bb):  # wgt in PyTorch (out, in) layout
        return jnp.dot(v.astype(mxu_dtype), wgt.T.astype(mxu_dtype),
                       preferred_element_type=jnp.float32) + bb.astype(jnp.float32)

    shortcut = x.astype(jnp.float32)
    xn = ln(x, p["norm1_g"], p["norm1_b"]).astype(mxu_dtype)
    if window_size > 0:
        xw, pad_hw = window_partition(xn, window_size)
        qh = qw = window_size
    else:
        xw, pad_hw = xn, (h, w)
        qh, qw = h, w
    bw = xw.shape[0]
    n = qh * qw

    qkv = lin(xw.reshape(bw * n, d), p["qkv_w"], p["qkv_b"]).astype(mxu_dtype)
    qkv = qkv.reshape(bw, n, 3, num_heads, hd).transpose(2, 0, 3, 1, 4)
    qkv = qkv.reshape(3, bw * num_heads, n, hd)
    q, k, v = qkv[0], qkv[1], qkv[2]

    s = jnp.einsum("bqc,bkc->bqk", q, k, preferred_element_type=jnp.float32) * scale
    if use_rel_pos:
        s = s + _decomposed_rel_pos_bias(q, p["rel_pos_h"], p["rel_pos_w"], (qh, qw), (qh, qw))
    s = s - jnp.max(s, axis=-1, keepdims=True)
    pr = jnp.exp(s)
    pr = pr / jnp.sum(pr, axis=-1, keepdims=True)
    o = jnp.einsum("bqk,bkc->bqc", pr.astype(mxu_dtype), v,
                   preferred_element_type=jnp.float32).astype(mxu_dtype)
    o = o.reshape(bw, num_heads, qh, qw, hd).transpose(0, 2, 3, 1, 4).reshape(bw * n, d)
    xo = lin(o, p["proj_w"], p["proj_b"]).reshape(bw, qh, qw, d)
    if window_size > 0:
        xo = window_unpartition(xo, window_size, pad_hw, (h, w))

    y = shortcut + xo
    yn = ln(y, p["norm2_g"], p["norm2_b"]).astype(mxu_dtype)
    hid = jnp.dot(yn, p["mlp_w1"].T.astype(mxu_dtype),
                  preferred_element_type=jnp.float32) + p["mlp_b1"].astype(jnp.float32)
    hid = jax.nn.gelu(hid, approximate=False)
    mlp = jnp.dot(hid.astype(mxu_dtype), p["mlp_w2"].T.astype(mxu_dtype),
                  preferred_element_type=jnp.float32) + p["mlp_b2"].astype(jnp.float32)
    return (y + mlp).astype(x.dtype)


# ----------------------------------------------------------------------------
# demo
# ----------------------------------------------------------------------------
if __name__ == "__main__":
    B, H, W = 2, 8, 8
    dim, num_heads = 64, 4
    mlp_dim = 256                 # mlp_ratio = 4.0
    window_size = 4
    use_rel_pos = True
    head_dim = dim // num_heads

    key = jax.random.PRNGKey(0)
    ks = jax.random.split(key, 14)

    x = jax.random.normal(ks[0], (B, H, W, dim), dtype=jnp.float32)

    def _linear_init(kw, kb, out_f, in_f):
        lim = 1.0 / (in_f ** 0.5)
        wgt = jax.random.uniform(kw, (out_f, in_f), minval=-lim, maxval=lim, dtype=jnp.float32)
        bias = jax.random.uniform(kb, (out_f,), minval=-lim, maxval=lim, dtype=jnp.float32)
        return wgt, bias

    qkv_w, qkv_b = _linear_init(ks[1], ks[2], 3 * dim, dim)
    proj_w, proj_b = _linear_init(ks[3], ks[4], dim, dim)
    mlp_w1, mlp_b1 = _linear_init(ks[5], ks[6], mlp_dim, dim)
    mlp_w2, mlp_b2 = _linear_init(ks[7], ks[8], dim, mlp_dim)
    norm1_g = 1.0 + 0.1 * jax.random.normal(ks[9], (dim,), dtype=jnp.float32)
    norm1_b = 0.1 * jax.random.normal(ks[10], (dim,), dtype=jnp.float32)
    norm2_g = 1.0 + 0.1 * jax.random.normal(ks[11], (dim,), dtype=jnp.float32)
    norm2_b = 0.1 * jax.random.normal(ks[12], (dim,), dtype=jnp.float32)
    rel_pos_h = 0.02 * jax.random.normal(ks[13], (2 * window_size - 1, head_dim), dtype=jnp.float32)
    rel_pos_w = 0.02 * jax.random.normal(jax.random.PRNGKey(1), (2 * window_size - 1, head_dim),
                                         dtype=jnp.float32)

    raw = dict(norm1_g=norm1_g, norm1_b=norm1_b, qkv_w=qkv_w, qkv_b=qkv_b,
               proj_w=proj_w, proj_b=proj_b, rel_pos_h=rel_pos_h, rel_pos_w=rel_pos_w,
               norm2_g=norm2_g, norm2_b=norm2_b,
               mlp_w1=mlp_w1, mlp_b1=mlp_b1, mlp_w2=mlp_w2, mlp_b2=mlp_b2)

    # One-time "model setup": pre-transpose to (in, out) and pre-cast MXU operands to bf16
    # (perf review: hoist transposes/casts out of the per-call forward path).
    mxu_dtype = jnp.bfloat16
    params = dict(
        norm1_g=norm1_g, norm1_b=norm1_b,
        qkv_wt=qkv_w.T.astype(mxu_dtype), qkv_b=qkv_b,
        proj_wt=proj_w.T.astype(mxu_dtype), proj_b=proj_b,
        rel_pos_h=rel_pos_h, rel_pos_w=rel_pos_w,
        norm2_g=norm2_g, norm2_b=norm2_b,
        mlp_w1t=mlp_w1.T.astype(mxu_dtype), mlp_b1=mlp_b1,
        mlp_w2t=mlp_w2.T.astype(mxu_dtype), mlp_b2=mlp_b2,
    )

    # Production defaults are tm=256, th_mlp=512; the toy shapes use smaller tiles so that the
    # multi-row-tile and multi-hidden-tile (accumulation / pl.when) paths are actually exercised.
    out = sam_block_forward(x, params, num_heads=num_heads, window_size=window_size,
                            use_rel_pos=use_rel_pos, tm=64, th_mlp=128, mxu_dtype=mxu_dtype)
    out = jax.block_until_ready(out)

    ref = _ref_block(x, raw, num_heads=num_heads, window_size=window_size,
                     use_rel_pos=use_rel_pos, mxu_dtype=mxu_dtype)

    assert out.shape == (B, H, W, dim)
    assert bool(jnp.allclose(out, ref, atol=2e-2, rtol=2e-2)), "mismatch vs reference"
    print("KERNEL_OK")
</pallas_src>

<mosaic_0001>
module attributes {stable_mosaic.version = 11 : i64} {
  func.func @_layernorm_kernel(%arg0: i32, %arg1: memref<64x64xf32, #tpu.memory_space<vmem>>, %arg2: memref<1x64xf32, #tpu.memory_space<vmem>>, %arg3: memref<1x64xf32, #tpu.memory_space<vmem>>, %arg4: memref<64x64xbf16, #tpu.memory_space<vmem>>) attributes {dimension_semantics = [#tpu.dimension_semantics<parallel>], iteration_bounds = array<i64: 2>, scalar_prefetch = 0 : i64, scratch_operands = 0 : i64, tpu.core_type = #tpu.core_type<tc>, window_params = [{transform_indices = @transform_0, window_bounds = array<i64: 64, 64>}, {pipeline_mode = #tpu.pipeline_mode<synchronous>, transform_indices = @transform_1, window_bounds = array<i64: 1, 64>}, {pipeline_mode = #tpu.pipeline_mode<synchronous>, transform_indices = @transform_2, window_bounds = array<i64: 1, 64>}, {transform_indices = @transform_3, window_bounds = array<i64: 64, 64>}]} {
    %c0 = arith.constant 0 : index
    %c0_0 = arith.constant 0 : index
    %0 = vector.load %arg1[%c0, %c0_0] : memref<64x64xf32, #tpu.memory_space<vmem>>, vector<64x64xf32>
    %cst = arith.constant dense<0.000000e+00> : vector<64xf32>
    %1 = vector.multi_reduction <add>, %0, %cst [1] : vector<64x64xf32> to vector<64xf32>
    %2 = vector.shape_cast %1 : vector<64xf32> to vector<64x1xf32>
    %cst_1 = arith.constant 6.400000e+01 : f32
    %3 = vector.broadcast %cst_1 : f32 to vector<64x1xf32>
    %4 = arith.divf %2, %3 : vector<64x1xf32>
    %5 = vector.broadcast %4 : vector<64x1xf32> to vector<64x64xf32>
    %6 = arith.subf %0, %5 : vector<64x64xf32>
    %7 = arith.mulf %6, %6 : vector<64x64xf32>
    %cst_2 = arith.constant dense<0.000000e+00> : vector<64xf32>
    %8 = vector.multi_reduction <add>, %7, %cst_2 [1] : vector<64x64xf32> to vector<64xf32>
    %9 = vector.shape_cast %8 : vector<64xf32> to vector<64x1xf32>
    %cst_3 = arith.constant 6.400000e+01 : f32
    %10 = vector.broadcast %cst_3 : f32 to vector<64x1xf32>
    %11 = arith.divf %9, %10 : vector<64x1xf32>
    %cst_4 = arith.constant 9.99999974E-6 : f32
    %12 = vector.broadcast %cst_4 : f32 to vector<64x1xf32>
    %13 = arith.addf %11, %12 : vector<64x1xf32>
    %14 = math.rsqrt %13 : vector<64x1xf32>
    %15 = vector.broadcast %14 : vector<64x1xf32> to vector<64x64xf32>
    %16 = arith.mulf %6, %15 : vector<64x64xf32>
    %c0_5 = arith.constant 0 : index
    %c0_6 = arith.constant 0 : index
    %17 = vector.load %arg2[%c0_5, %c0_6] : memref<1x64xf32, #tpu.memory_space<vmem>>, vector<1x64xf32>
    %18 = vector.broadcast %17 : vector<1x64xf32> to vector<64x64xf32>
    %19 = arith.mulf %16, %18 : vector<64x64xf32>
    %c0_7 = arith.constant 0 : index
    %c0_8 = arith.constant 0 : index
    %20 = vector.load %arg3[%c0_7, %c0_8] : memref<1x64xf32, #tpu.memory_space<vmem>>, vector<1x64xf32>
    %21 = vector.broadcast %20 : vector<1x64xf32> to vector<64x64xf32>
    %22 = arith.addf %19, %21 : vector<64x64xf32>
    %23 = arith.truncf %22 : vector<64x64xf32> to vector<64x64xbf16>
    %c0_9 = arith.constant 0 : index
    %c0_10 = arith.constant 0 : index
    %24 = vector.load %arg4[%c0_9, %c0_10] : memref<64x64xbf16, #tpu.memory_space<vmem>>, vector<64x64xbf16>
    tpu.vector_store %arg4[%c0_9, %c0_10], %23 {strides = array<i32>} : memref<64x64xbf16, #tpu.memory_space<vmem>>, vector<64x64xbf16>,
    return
  }
  func.func @transform_0(%arg0: i32) -> (i32, i32) {
    %c0_i32 = arith.constant 0 : i32
    %c0_i32_0 = arith.constant 0 : i32
    return %arg0, %c0_i32 : i32, i32
  }
  func.func @transform_1(%arg0: i32) -> (i32, i32) {
    %c0_i32 = arith.constant 0 : i32
    %c0_i32_0 = arith.constant 0 : i32
    %c0_i32_1 = arith.constant 0 : i32
    return %c0_i32, %c0_i32_0 : i32, i32
  }
  func.func @transform_2(%arg0: i32) -> (i32, i32) {
    %c0_i32 = arith.constant 0 : i32
    %c0_i32_0 = arith.constant 0 : i32
    %c0_i32_1 = arith.constant 0 : i32
    return %c0_i32, %c0_i32_0 : i32, i32
  }
  func.func @transform_3(%arg0: i32) -> (i32, i32) {
    %c0_i32 = arith.constant 0 : i32
    %c0_i32_0 = arith.constant 0 : i32
    return %arg0, %c0_i32 : i32, i32
  }
}

</mosaic_0001>

<llo_original>
// kernel: tpu_custom_call.1
$region0: #{tpu_custom_call.1}
  #allocation0 [shape = 'u32[]', space=smem, size = 0x4, offset = 0x4, fixed_abs, tag = 'smem constant byte address 0x4 - core index']
  #allocation1 [shape = 'u32[72,128]{1,0:T(1,128)}', space=vmem, size = 0x9000, scoped, tag = 'internal scratch']
  %s0 = inlined_call_operand.vmem [shape: f32[128,64], index: 0, kind: input, shape index: {}]
  %s1 = inlined_call_operand.vmem [shape: f32[1,64], index: 1, kind: input, shape index: {}]
  %s2 = inlined_call_operand.vmem [shape: f32[1,64], index: 2, kind: input, shape index: {}]
  %s3 = inlined_call_operand.vmem [shape: bf16[128,64], index: 3, kind: output, shape index: {}]
  %s4 = sld [smem:[#allocation0]]
  $region45: #{tpu_custom_call.1} parent=0
    _
  %s6 = ssub.s32 1, %s4
  %s7 = scalar_select 0, %s6, %s4
  loop: start=0, step=1, limit=4
  $region2: #{tpu_custom_call.1} parent=0 // loop_pre_header
    _
  $region3: #{tpu_custom_call.1} parent=0 // loop_header
    %s9 = sphi 0, %s13
    %p10 = scmp.ge.s32.totalorder %s9, 4
    %s19 = sphi 0, %s21
    %s22 = sphi 0, %s19
    %s23 = sphi 0, %s22
    %s39 = sphi 0, %s23
    %s43 = sphi 0, %s43
    %s45 = sphi 0, %s43
    %s46 = sphi 0, %s45
    %s60 = sphi 0, %s46
    %s64 = sphi 0, %s64
    %s66 = sphi 0, %s64
    %s67 = sphi 0, %s66
    %s81 = sphi 0, %s67
    %s87 = sphi 0, %s89
    %s90 = sphi 0, %s87
    %s91 = sphi 0, %s90
    %s107 = sphi 0, %s91
  $region4: #{tpu_custom_call.1} parent=0 // loop_header_branch
    %12 = sbr.rel (%p10) target = $region8
  $region5: #{tpu_custom_call.1} parent=0 // loop_body
    %s14 = ssub.s32 %s9, 1
    %s15 = ssub.s32 %s9, 2
    %s16 = sadd.s32 %s9, 1
    %s17 = ssub.s32 %s9, %s16
    %p18 = scmp.eq.s32.totalorder %s17, 0
    %s20 = sadd.s32 %s19, 1
    %s21 = scalar_select %p18, %s19, %s20
    %p24 = pneg %p18
    %p25 = scmp.eq.s32.totalorder %s9, 1
    %p26 = por %p24, %p25
    %p27 = scmp.ne.s32.totalorder %s19, %s22
    %p28 = scmp.eq.s32.totalorder %s9, 0
    %p29 = por %p27, %p28
    %p30 = scmp.ne.s32.totalorder %s19, %s22
    %p31 = scmp.eq.s32.totalorder %s14, 1
    %p32 = por %p30, %p31
    %p33 = scmp.ne.s32.totalorder %s22, %s23
    %p34 = scmp.eq.s32.totalorder %s14, 0
    %p35 = por %p33, %p34
    %p36 = scmp.ne.s32.totalorder %s22, %s23
    %p37 = scmp.eq.s32.totalorder %s15, 1
    %p38 = por %p36, %p37
    %p40 = scmp.ne.s32.totalorder %s23, %s39
    %p41 = scmp.eq.s32.totalorder %s15, 0
    %p42 = por %p40, %p41
    %s44 = sadd.s32 %s43, 1
    %p47 = scmp.eq.s32.totalorder %s9, 1
    %p48 = scmp.ne.s32.totalorder %s43, %s45
    %p49 = scmp.eq.s32.totalorder %s9, 0
    %p50 = por %p48, %p49
    %p51 = scmp.ne.s32.totalorder %s43, %s45
    %p52 = scmp.eq.s32.totalorder %s14, 1
    %p53 = por %p51, %p52
    %p54 = scmp.ne.s32.totalorder %s45, %s46
    %p55 = scmp.eq.s32.totalorder %s14, 0
    %p56 = por %p54, %p55
    %p57 = scmp.ne.s32.totalorder %s45, %s46
    %p58 = scmp.eq.s32.totalorder %s15, 1
    %p59 = por %p57, %p58
    %p61 = scmp.ne.s32.totalorder %s46, %s60
    %p62 = scmp.eq.s32.totalorder %s15, 0
    %p63 = por %p61, %p62
    %s65 = sadd.s32 %s64, 1
    %p68 = scmp.eq.s32.totalorder %s9, 1
    %p69 = scmp.ne.s32.totalorder %s64, %s66
    %p70 = scmp.eq.s32.totalorder %s9, 0
    %p71 = por %p69, %p70
    %p72 = scmp.ne.s32.totalorder %s64, %s66
    %p73 = scmp.eq.s32.totalorder %s14, 1
    %p74 = por %p72, %p73
    %p75 = scmp.ne.s32.totalorder %s66, %s67
    %p76 = scmp.eq.s32.totalorder %s14, 0
    %p77 = por %p75, %p76
    %p78 = scmp.ne.s32.totalorder %s66, %s67
    %p79 = scmp.eq.s32.totalorder %s15, 1
    %p80 = por %p78, %p79
    %p82 = scmp.ne.s32.totalorder %s67, %s81
    %p83 = scmp.eq.s32.totalorder %s15, 0
    %p84 = por %p82, %p83
    %s85 = ssub.s32 %s9, %s16
    %p86 = scmp.eq.s32.totalorder %s85, 0
    %s88 = sadd.s32 %s87, 1
    %s89 = scalar_select %p86, %s87, %s88
    %p92 = pneg %p86
    %p93 = scmp.eq.s32.totalorder %s9, 1
    %p94 = por %p92, %p93
    %p95 = scmp.ne.s32.totalorder %s87, %s90
    %p96 = scmp.eq.s32.totalorder %s9, 0
    %p97 = por %p95, %p96
    %p98 = scmp.ne.s32.totalorder %s87, %s90
    %p99 = scmp.eq.s32.totalorder %s14, 1
    %p100 = por %p98, %p99
    %p101 = scmp.ne.s32.totalorder %s90, %s91
    %p102 = scmp.eq.s32.totalorder %s14, 0
    %p103 = por %p101, %p102
    %p104 = scmp.ne.s32.totalorder %s90, %s91
    %p105 = scmp.eq.s32.totalorder %s15, 1
    %p106 = por %p104, %p105
    %p108 = scmp.ne.s32.totalorder %s91, %s107
    %p109 = scmp.eq.s32.totalorder %s15, 0
    %p110 = por %p108, %p109
    %p111 = scmp.le.s32.totalorder 1, %s9
    %p112 = scmp.lt.s32.totalorder %s9, 3
    %p113 = pnand %p111, %p112
    %p114 = pneg %p113
    // Predicated region
    $region9: #{tpu_custom_call.1} parent=5 // pred_check
      _
    $region10: #{tpu_custom_call.1} parent=5 // pred_check_branch
      %116 = sbr.rel (%p113) target = $region12
    $region11: #{tpu_custom_call.1} parent=5 // pred_region
      %s117 = ssub.s32 %s9, 1
      // Predicated region
      $region13: #{tpu_custom_call.1} parent=11 // pred_check
        %p118 = pneg %p56
      $region14: #{tpu_custom_call.1} parent=11 // pred_check_branch
        %120 = sbr.rel (%p118) target = $region16
      $region15: #{tpu_custom_call.1} parent=11 // pred_region
        _
      $region16: #{tpu_custom_call.1} parent=11 // pred_fallthru
        _
      // Predicated region
      $region17: #{tpu_custom_call.1} parent=11 // pred_check
        %p121 = pneg %p77
      $region18: #{tpu_custom_call.1} parent=11 // pred_check_branch
        %123 = sbr.rel (%p121) target = $region20
      $region19: #{tpu_custom_call.1} parent=11 // pred_region
        _
      $region20: #{tpu_custom_call.1} parent=11 // pred_fallthru
        _
    $region12: #{tpu_custom_call.1} parent=5 // pred_fallthru
      _
    %p124 = scmp.lt.s32.totalorder %s9, 2
    // Predicated region
    $region21: #{tpu_custom_call.1} parent=5 // pred_check
      %p125 = pneg %p124
    $region22: #{tpu_custom_call.1} parent=5 // pred_check_branch
      %127 = sbr.rel (%p125) target = $region24
    $region23: #{tpu_custom_call.1} parent=5 // pred_region
      // Predicated region
      $region25: #{tpu_custom_call.1} parent=23 // pred_check
        %p128 = pneg %p29
      $region26: #{tpu_custom_call.1} parent=23 // pred_check_branch
        %130 = sbr.rel (%p128) target = $region28
      $region27: #{tpu_custom_call.1} parent=23 // pred_region
        %s131 = smul.u32 8, %s9
        %p132 = scmp.lt.s32.totalorder %s131, 15
        %s133 = scalar_select %p132, %s131, 15
        %s134 = smul.addr %s133, 8
        %s135 = scalar_lea.vmem %s0, %s134
        %s136 = smul.u32 8, %s9
      $region28: #{tpu_custom_call.1} parent=23 // pred_fallthru
        _
    $region24: #{tpu_custom_call.1} parent=5 // pred_fallthru
      _
    %p137 = scmp.le.s32.totalorder 1, %s9
    %p138 = scmp.lt.s32.totalorder %s9, 3
    %p139 = pnand %p137, %p138
    %p140 = pneg %p139
    // Predicated region
    $region29: #{tpu_custom_call.1} parent=5 // pred_check
      _
    $region30: #{tpu_custom_call.1} parent=5 // pred_check_branch
      %142 = sbr.rel (%p139) target = $region32
    $region31: #{tpu_custom_call.1} parent=5 // pred_region
      %s143 = ssub.s32 %s9, 1
      %s144 = smul.u32 8, %s14
      %p145 = scmp.lt.s32.totalorder %s144, 15
      %s146 = scalar_select %p145, %s144, 15
      %s147 = smul.addr %s146, 8
      %s148 = scalar_lea.vmem %s0, %s147
      %p149 = pneg %p35
      %p150 = pneg %p32
      %p151 = pneg %p56
      %p152 = pneg %p53
      %p153 = pneg %p77
      %p154 = pneg %p74
      %p155 = pneg %p103
      %p156 = pneg %p100
      %s157 = smul.u32 8, %s14
      %p158 = scmp.lt.s32.totalorder %s157, 15
      %s159 = scalar_select %p158, %s157, 15
      %s160 = smul.addr %s159, 4
      %s161 = scalar_lea.vmem %s3, %s160
      %s162 = smul.u32 8, %s14
      %p163 = scmp.lt.s32.totalorder %s162, 15
      %s164 = scalar_select %p163, %s162, 15
      %s165 = smul.addr %s164, 8
      %s166 = scalar_lea.vmem %s0, %s165
      %s167 = smul.u32 8, %s14
      %s168 = smul.u32 8, %s14
      %p169 = scmp.lt.s32.totalorder %s168, 15
      %s170 = scalar_select %p169, %s168, 15
      %s171 = smul.addr %s170, 4
      %s172 = scalar_lea.vmem %s3, %s171
      %s173 = smul.u32 8, %s14
      %v174 = vld [vmem:[%s166] sm:$0xff]
      %v175 = vld [vmem:[%s166 + $0x8] sm:$0xff]
      %v176 = vld [vmem:[%s166 + $0x10] sm:$0xff]
      %v177 = vld [vmem:[%s166 + $0x18] sm:$0xff]
      %v178 = vld [vmem:[%s166 + $0x20] sm:$0xff]
      %v179 = vld [vmem:[%s166 + $0x28] sm:$0xff]
      %v180 = vld [vmem:[%s166 + $0x30] sm:$0xff]
      %v181 = vld [vmem:[%s166 + $0x38] sm:$0xff]
      %vm182 = vcmask 523264
      %v183 = vsel %vm182, %v174, 0.0
      %184 = vadd.xlane.f32.xlu0 %v183
      %v185 = vpop.xlane.xlu0 %184
      %v186 = vsel %vm182, %v175, 0.0
      %187 = vadd.xlane.f32.xlu0 %v186
      %v188 = vpop.xlane.xlu0 %187
      %v189 = vsel %vm182, %v176, 0.0
      %190 = vadd.xlane.f32.xlu0 %v189
      %v191 = vpop.xlane.xlu0 %190
      %v192 = vsel %vm182, %v177, 0.0
      %193 = vadd.xlane.f32.xlu0 %v192
      %v194 = vpop.xlane.xlu0 %193
      %v195 = vsel %vm182, %v178, 0.0
      %196 = vadd.xlane.f32.xlu0 %v195
      %v197 = vpop.xlane.xlu0 %196
      %v198 = vsel %vm182, %v179, 0.0
      %199 = vadd.xlane.f32.xlu0 %v198
      %v200 = vpop.xlane.xlu0 %199
      %v201 = vsel %vm182, %v180, 0.0
      %202 = vadd.xlane.f32.xlu0 %v201
      %v203 = vpop.xlane.xlu0 %202
      %v204 = vsel %vm182, %v181, 0.0
      %205 = vadd.xlane.f32.xlu0 %v204
      %v206 = vpop.xlane.xlu0 %205
      %v207 = vrcp.pop 64.0
      %v208 = vmul.f32 64.0, %v207
      %v209 = vsub.f32 1.0, %v208
      %v210 = vmul.f32 %v207, %v209
      %v211 = vadd.f32 %v207, %v210
      %vm212 = vweird.f32 %v207
      %v213 = vsel %vm212, %v207, %v211
      %v214 = vmul.f32 %v185, %v213
      %v215 = vmul.f32 %v188, %v213
      %v216 = vmul.f32 %v191, %v213
      %v217 = vmul.f32 %v194, %v213
      %v218 = vmul.f32 %v197, %v213
      %v219 = vmul.f32 %v200, %v213
      %v220 = vmul.f32 %v203, %v213
      %v221 = vmul.f32 %v206, %v213
      %v222 = vsub.f32 %v174, %v214
      %v223 = vsub.f32 %v175, %v215
      %v224 = vsub.f32 %v176, %v216
      %v225 = vsub.f32 %v177, %v217
      %v226 = vsub.f32 %v178, %v218
      %v227 = vsub.f32 %v179, %v219
      %v228 = vsub.f32 %v180, %v220
      %v229 = vsub.f32 %v181, %v221
      %v230 = vmul.f32 %v222, %v222
      %v231 = vmul.f32 %v223, %v223
      %v232 = vmul.f32 %v224, %v224
      %v233 = vmul.f32 %v225, %v225
      %v234 = vmul.f32 %v226, %v226
      %v235 = vmul.f32 %v227, %v227
      %v236 = vmul.f32 %v228, %v228
      %v237 = vmul.f32 %v229, %v229
      %v238 = vsel %vm182, %v230, 0.0
      %239 = vadd.xlane.f32.xlu0 %v238
      %v240 = vpop.xlane.xlu0 %239
      %v241 = vsel %vm182, %v231, 0.0
      %242 = vadd.xlane.f32.xlu0 %v241
      %v243 = vpop.xlane.xlu0 %242
      %v244 = vsel %vm182, %v232, 0.0
      %245 = vadd.xlane.f32.xlu0 %v244
      %v246 = vpop.xlane.xlu0 %245
      %v247 = vsel %vm182, %v233, 0.0
      %248 = vadd.xlane.f32.xlu0 %v247
      %v249 = vpop.xlane.xlu0 %248
      %v250 = vsel %vm182, %v234, 0.0
      %251 = vadd.xlane.f32.xlu0 %v250
      %v252 = vpop.xlane.xlu0 %251
      %v253 = vsel %vm182, %v235, 0.0
      %254 = vadd.xlane.f32.xlu0 %v253
      %v255 = vpop.xlane.xlu0 %254
      %v256 = vsel %vm182, %v236, 0.0
      %257 = vadd.xlane.f32.xlu0 %v256
      %v258 = vpop.xlane.xlu0 %257
      %v259 = vsel %vm182, %v237, 0.0
      %260 = vadd.xlane.f32.xlu0 %v259
      %v261 = vpop.xlane.xlu0 %260
      %v262 = vmul.f32 %v240, %v213
      %v263 = vmul.f32 %v243, %v213
      %v264 = vmul.f32 %v246, %v213
      %v265 = vmul.f32 %v249, %v213
      %v266 = vmul.f32 %v252, %v213
      %v267 = vmul.f32 %v255, %v213
      %v268 = vmul.f32 %v258, %v213
      %v269 = vmul.f32 %v261, %v213
      %v270 = vadd.f32 %v262, 1e-05
      %v271 = vadd.f32 %v263, 1e-05
      %v272 = vadd.f32 %v264, 1e-05
      %v273 = vadd.f32 %v265, 1e-05
      %v274 = vadd.f32 %v266, 1e-05
      %v275 = vadd.f32 %v267, 1e-05
      %v276 = vadd.f32 %v268, 1e-05
      %v277 = vadd.f32 %v269, 1e-05
      %v278 = vrsqrt.pop %v270
      %v279 = vmul.f32 %v278, %v270
      %v280 = vmul.f32 %v279, %v278
      %v281 = vmul.f32 0.5, %v280
      %v282 = vsub.f32 1.5, %v281
      %v283 = vmul.f32 %v278, %v282
      %vm284 = vweird.f32 %v270
      %vm285 = vweird.f32 %v278
      %vm286 = vmor %vm284, %vm285
      %v287 = vsel %vm286, %v278, %v283
      %v288 = vrsqrt.pop %v271
      %v289 = vmul.f32 %v288, %v271
      %v290 = vmul.f32 %v289, %v288
      %v291 = vmul.f32 0.5, %v290
      %v292 = vsub.f32 1.5, %v291
      %v293 = vmul.f32 %v288, %v292
      %vm294 = vweird.f32 %v271
      %vm295 = vweird.f32 %v288
      %vm296 = vmor %vm294, %vm295
      %v297 = vsel %vm296, %v288, %v293
      %v298 = vrsqrt.pop %v272
      %v299 = vmul.f32 %v298, %v272
      %v300 = vmul.f32 %v299, %v298
      %v301 = vmul.f32 0.5, %v300
      %v302 = vsub.f32 1.5, %v301
      %v303 = vmul.f32 %v298, %v302
      %vm304 = vweird.f32 %v272
      %vm305 = vweird.f32 %v298
      %vm306 = vmor %vm304, %vm305
      %v307 = vsel %vm306, %v298, %v303
      %v308 = vrsqrt.pop %v273
      %v309 = vmul.f32 %v308, %v273
      %v310 = vmul.f32 %v309, %v308
      %v311 = vmul.f32 0.5, %v310
      %v312 = vsub.f32 1.5, %v311
      %v313 = vmul.f32 %v308, %v312
      %vm314 = vweird.f32 %v273
      %vm315 = vweird.f32 %v308
      %vm316 = vmor %vm314, %vm315
      %v317 = vsel %vm316, %v308, %v313
      %v318 = vrsqrt.pop %v274
      %v319 = vmul.f32 %v318, %v274
      %v320 = vmul.f32 %v319, %v318
      %v321 = vmul.f32 0.5, %v320
      %v322 = vsub.f32 1.5, %v321
      %v323 = vmul.f32 %v318, %v322
      %vm324 = vweird.f32 %v274
      %vm325 = vweird.f32 %v318
      %vm326 = vmor %vm324, %vm325
      %v327 = vsel %vm326, %v318, %v323
      %v328 = vrsqrt.pop %v275
      %v329 = vmul.f32 %v328, %v275
      %v330 = vmul.f32 %v329, %v328
      %v331 = vmul.f32 0.5, %v330
      %v332 = vsub.f32 1.5, %v331
      %v333 = vmul.f32 %v328, %v332
      %vm334 = vweird.f32 %v275
      %vm335 = vweird.f32 %v328
      %vm336 = vmor %vm334, %vm335
      %v337 = vsel %vm336, %v328, %v333
      %v338 = vrsqrt.pop %v276
      %v339 = vmul.f32 %v338, %v276
      %v340 = vmul.f32 %v339, %v338
      %v341 = vmul.f32 0.5, %v340
      %v342 = vsub.f32 1.5, %v341
      %v343 = vmul.f32 %v338, %v342
      %vm344 = vweird.f32 %v276
      %vm345 = vweird.f32 %v338
      %vm346 = vmor %vm344, %vm345
      %v347 = vsel %vm346, %v338, %v343
      %v348 = vrsqrt.pop %v277
      %v349 = vmul.f32 %v348, %v277
      %v350 = vmul.f32 %v349, %v348
      %v351 = vmul.f32 0.5, %v350
      %v352 = vsub.f32 1.5, %v351
      %v353 = vmul.f32 %v348, %v352
      %vm354 = vweird.f32 %v277
      %vm355 = vweird.f32 %v348
      %vm356 = vmor %vm354, %vm355
      %v357 = vsel %vm356, %v348, %v353
      %v358 = vmul.f32 %v222, %v287
      %v359 = vmul.f32 %v223, %v297
      %v360 = vmul.f32 %v224, %v307
      %v361 = vmul.f32 %v225, %v317
      %v362 = vmul.f32 %v226, %v327
      %v363 = vmul.f32 %v227, %v337
      %v364 = vmul.f32 %v228, %v347
      %v365 = vmul.f32 %v229, %v357
      %v366 = vld [vmem:[%s1] sm:$0x1]
      %v368 = vperm.slane %v366, 0
      %v370 = vmul.f32 %v358, %v368
      %v371 = vmul.f32 %v359, %v368
      %v372 = vmul.f32 %v360, %v368
      %v373 = vmul.f32 %v361, %v368
      %v374 = vmul.f32 %v362, %v368
      %v375 = vmul.f32 %v363, %v368
      %v376 = vmul.f32 %v364, %v368
      %v377 = vmul.f32 %v365, %v368
      %v378 = vld [vmem:[%s2] sm:$0x1]
      %v380 = vperm.slane %v378, 0
      %v382 = vadd.f32 %v370, %v380
      %v383 = vadd.f32 %v371, %v380
      %v384 = vadd.f32 %v372, %v380
      %v385 = vadd.f32 %v373, %v380
      %v386 = vadd.f32 %v374, %v380
      %v387 = vadd.f32 %v375, %v380
      %v388 = vadd.f32 %v376, %v380
      %v389 = vadd.f32 %v377, %v380
      %v390 = vpack.c.bf16 %v382, %v382
      %v391 = vpack.c.bf16 %v383, %v383
      %v392 = vpack.c.bf16 %v384, %v384
      %v393 = vpack.c.bf16 %v385, %v385
      %v394 = vpack.c.bf16 %v386, %v386
      %v395 = vpack.c.bf16 %v387, %v387
      %v396 = vpack.c.bf16 %v388, %v388
      %v397 = vpack.c.bf16 %v389, %v389
      %vm398 = vcmask 519168
      %399 = vst.msk [vmem:[%s172] sm:$0xf] %vm398, %v390
      %400 = vst.msk [vmem:[%s172 + $0x4] sm:$0xf] %vm398, %v391
      %401 = vst.msk [vmem:[%s172 + $0x8] sm:$0xf] %vm398, %v392
      %402 = vst.msk [vmem:[%s172 + $0xc] sm:$0xf] %vm398, %v393
      %403 = vst.msk [vmem:[%s172 + $0x10] sm:$0xf] %vm398, %v394
      %404 = vst.msk [vmem:[%s172 + $0x14] sm:$0xf] %vm398, %v395
      %405 = vst.msk [vmem:[%s172 + $0x18] sm:$0xf] %vm398, %v396
      %406 = vst.msk [vmem:[%s172 + $0x1c] sm:$0xf] %vm398, %v397
      %s407 = smul.u32 8, %s14
      %p408 = scmp.lt.s32.totalorder %s407, 15
      %s409 = scalar_select %p408, %s407, 15
      %s410 = smul.addr %s409, 4
      %s411 = scalar_lea.vmem %s3, %s410
      // Predicated region
      $region33: #{tpu_custom_call.1} parent=31 // pred_check
        %p412 = pneg %p100
      $region34: #{tpu_custom_call.1} parent=31 // pred_check_branch
        %414 = sbr.rel (%p412) target = $region36
      $region35: #{tpu_custom_call.1} parent=31 // pred_region
        %s415 = smul.u32 8, %s14
      $region36: #{tpu_custom_call.1} parent=31 // pred_fallthru
        _
    $region32: #{tpu_custom_call.1} parent=5 // pred_fallthru
      _
    %p416 = scmp.le.s32.totalorder 2, %s9
    // Predicated region
    $region37: #{tpu_custom_call.1} parent=5 // pred_check
      %p417 = pneg %p416
    $region38: #{tpu_custom_call.1} parent=5 // pred_check_branch
      %419 = sbr.rel (%p417) target = $region40
    $region39: #{tpu_custom_call.1} parent=5 // pred_region
      %s420 = ssub.s32 %s9, 2
      // Predicated region
      $region41: #{tpu_custom_call.1} parent=39 // pred_check
        %p421 = pneg %p106
      $region42: #{tpu_custom_call.1} parent=39 // pred_check_branch
        %423 = sbr.rel (%p421) target = $region44
      $region43: #{tpu_custom_call.1} parent=39 // pred_region
        %s424 = smul.u32 8, %s15
        %p425 = scmp.lt.s32.totalorder %s424, 15
        %s426 = scalar_select %p425, %s424, 15
        %s427 = smul.addr %s426, 4
        %s428 = scalar_lea.vmem %s3, %s427
      $region44: #{tpu_custom_call.1} parent=39 // pred_fallthru
        _
    $region40: #{tpu_custom_call.1} parent=5 // pred_fallthru
      _
  $region6: #{tpu_custom_call.1} parent=0 // loop_footer
    %s13 = sadd.s32 1, %s9
  $region7: #{tpu_custom_call.1} parent=0 // loop_footer_branch
    %8 = sbr.rel target = $region3
  $region8: #{tpu_custom_call.1} parent=0 // loop_exit
    _

</llo_original>
